<compile_context>
chip_gen: v7x
topology: tpu7x:2x2x1
jax: 0.10.0
libtpu: 0.0.40
codegen_flags: <defaults>
</compile_context>

<pallas_src>
import jax
import jax.numpy as jnp
from jax.experimental import pallas as pl
from jax.experimental.pallas import tpu as pltpu


def _round_up(v, m):
    return (v + m - 1) // m * m


def _conv1x1_bias_kernel(x_ref, w_ref, b_ref, o_ref):
    # x_ref: (P*Cin, ts), w_ref: (P*Cout, P*Cin), b_ref: (P*Cout, 1) f32,
    # o_ref: (P*Cout, ts)
    acc = jnp.dot(w_ref[...], x_ref[...], preferred_element_type=jnp.float32)
    o_ref[...] = (acc + b_ref[...]).astype(o_ref.dtype)


def conv3d_1x1_pad1_add(x, weight, bias, other1=1.0, *, ts=4096):
    """x: (N, Cin, D, H, W) NCDHW, weight: (Cout, Cin), bias: (Cout,)."""
    N, Cin, D, H, W = x.shape
    Cout = weight.shape[0]
    Dp, Hp, Wp = D + 2, H + 2, W + 2
    Sp = Dp * Hp * Wp

    # Batch packing factor: block-diagonal weight fills more of the MXU
    # (256x256 on v6e/v7x with P=4, 128x128 on v5e with P=2) and divides the
    # number of serial grid steps by P.
    P = 1
    for cand in (4, 2):
        if N % cand == 0 and cand * max(Cin, Cout) <= 256:
            P = cand
            break
    G = N // P

    # Zero-pad the halo once (1x1x1 conv of a zero voxel is zero, so the padded
    # border equals bias + other1 automatically).  The pad+reshape producer is
    # allowed to fuse into the Pallas input below.
    xp = jnp.pad(x, ((0, 0), (0, 0), (1, 1), (1, 1), (1, 1)))
    xf = xp.reshape(G, P * Cin, Sp)  # free view: N is outermost

    # Lane tile: multiple of 128, clamped to the padded spatial extent; keep at
    # least 2 spatial tiles when the batch-group axis is a single entry so both
    # v7x TensorCores get work.
    sp128 = _round_up(Sp, 128)
    ts = min(int(ts), sp128)
    if G == 1:
        ts = min(ts, _round_up(pl.cdiv(sp128, 2), 128))
    ts = max(128, _round_up(ts, 128))
    if ts >= Sp:
        ts = Sp  # one full-width tile (full-dim block is always layout-legal)
    n_t = pl.cdiv(Sp, ts)

    # Keep weights in f32 (matches the PyTorch reference precision); fold
    # other1 into an f32 bias column.
    w32 = weight.astype(jnp.float32)
    w_bd = jnp.kron(jnp.eye(P, dtype=jnp.float32), w32)          # (P*Cout, P*Cin)
    b_bd = jnp.tile(bias.astype(jnp.float32) + jnp.float32(other1), P)
    b_bd = b_bd.reshape(P * Cout, 1)

    itemsize = jnp.dtype(x.dtype).itemsize
    flops = 2 * N * Cout * Cin * Sp
    bytes_accessed = int((N * Cin * Sp + N * Cout * Sp) * itemsize
                         + w_bd.size * 4 + b_bd.size * 4)

    # TODO(synk): for tiny spatial sizes (e.g. 6^3) compute the interior only
    # and fill the border with a bias broadcast to skip matmuls on guaranteed
    # zero voxels.
    out_flat = pl.pallas_call(
        _conv1x1_bias_kernel,
        out_shape=jax.ShapeDtypeStruct((G, P * Cout, Sp), x.dtype),
        grid_spec=pltpu.PrefetchScalarGridSpec(
            num_scalar_prefetch=0,
            grid=(G, n_t),
            in_specs=[
                pl.BlockSpec((None, P * Cin, ts), lambda g, t: (g, 0, t)),
                pl.BlockSpec((P * Cout, P * Cin), lambda g, t: (0, 0)),
                pl.BlockSpec((P * Cout, 1), lambda g, t: (0, 0)),
            ],
            out_specs=pl.BlockSpec((None, P * Cout, ts), lambda g, t: (g, 0, t)),
        ),
        compiler_params=pltpu.CompilerParams(
            dimension_semantics=("parallel", "parallel"),
            vmem_limit_bytes=32 * 1024 * 1024,
            allow_input_fusion=[True, False, False],
        ),
        cost_estimate=pl.CostEstimate(
            flops=flops, transcendentals=0, bytes_accessed=bytes_accessed),
    )(xf, w_bd, b_bd)

    # Free reshapes back to NCDHW (padded output shape).
    return out_flat.reshape(N, Cout, Dp, Hp, Wp)


if __name__ == "__main__":
    key = jax.random.PRNGKey(0)
    kx, kw, kb = jax.random.split(key, 3)

    # Module requires 64 in/out channels; keep spatial dims small.
    N, C, D, H, W = 2, 64, 6, 6, 6
    x = jax.random.normal(kx, (N, C, D, H, W), dtype=jnp.float32)

    # Deterministic Conv3d(64, 64, 1) parameters (1x1x1 kernel == matrix).
    fan_in = C  # Cin * 1 * 1 * 1
    bound = 1.0 / (fan_in ** 0.5)
    weight = jax.random.uniform(kw, (C, C), jnp.float32, -bound, bound)
    bias = jax.random.uniform(kb, (C,), jnp.float32, -bound, bound)

    other1 = 1.0
    out = conv3d_1x1_pad1_add(x, weight, bias, other1)
    out = jax.block_until_ready(out)

    # Plain-JAX reference: conv1x1(zero-pad(x)) + bias + other1.
    xp = jnp.pad(x, ((0, 0), (0, 0), (1, 1), (1, 1), (1, 1)))
    ref = (jnp.einsum("oc,ncdhw->nodhw", weight, xp)
           + bias[None, :, None, None, None] + other1)

    assert out.shape == (N, C, D + 2, H + 2, W + 2)
    assert jnp.allclose(out, ref, atol=1e-4, rtol=1e-4)
    print("KERNEL_OK")
</pallas_src>

<mosaic_0001>
module attributes {stable_mosaic.version = 11 : i64} {
  func.func @_conv1x1_bias_kernel(%arg0: i32, %arg1: i32, %arg2: memref<1x128x256xf32, #tpu.memory_space<vmem>>, %arg3: memref<128x128xf32, #tpu.memory_space<vmem>>, %arg4: memref<128x1xf32, #tpu.memory_space<vmem>>, %arg5: memref<1x128x256xf32, #tpu.memory_space<vmem>>) attributes {dimension_semantics = [#tpu.dimension_semantics<parallel>, #tpu.dimension_semantics<parallel>], iteration_bounds = array<i64: 1, 2>, scalar_prefetch = 0 : i64, scratch_operands = 0 : i64, tpu.core_type = #tpu.core_type<tc>, window_params = [{transform_indices = @transform_0, window_bounds = array<i64: 1, 128, 256>}, {pipeline_mode = #tpu.pipeline_mode<synchronous>, transform_indices = @transform_1, window_bounds = array<i64: 128, 128>}, {pipeline_mode = #tpu.pipeline_mode<synchronous>, transform_indices = @transform_2, window_bounds = array<i64: 128, 1>}, {transform_indices = @transform_3, window_bounds = array<i64: 1, 128, 256>}]} {
    %c0 = arith.constant 0 : index
    %c0_0 = arith.constant 0 : index
    %0 = vector.load %arg3[%c0, %c0_0] : memref<128x128xf32, #tpu.memory_space<vmem>>, vector<128x128xf32>
    %c0_1 = arith.constant 0 : index
    %c0_2 = arith.constant 0 : index
    %c0_3 = arith.constant 0 : index
    %1 = vector.load %arg2[%c0_1, %c0_2, %c0_3] : memref<1x128x256xf32, #tpu.memory_space<vmem>>, vector<1x128x256xf32>
    %2 = vector.shape_cast %1 : vector<1x128x256xf32> to vector<128x256xf32>
    %cst = arith.constant dense<0.000000e+00> : vector<128x256xf32>
    %3 = tpu.matmul %0, %2, %cst {dimension_numbers = #tpu.dot_dimension_numbers<[1], [0], [0], [1], [0, 0, 1, 1], [], []>} : vector<128x128xf32>, vector<128x256xf32>, vector<128x256xf32> -> vector<128x256xf32>
    %c0_4 = arith.constant 0 : index
    %c0_5 = arith.constant 0 : index
    %4 = vector.load %arg4[%c0_4, %c0_5] : memref<128x1xf32, #tpu.memory_space<vmem>>, vector<128x1xf32>
    %5 = vector.broadcast %4 : vector<128x1xf32> to vector<128x256xf32>
    %6 = arith.addf %3, %5 : vector<128x256xf32>
    %c0_6 = arith.constant 0 : index
    %c0_7 = arith.constant 0 : index
    %c0_8 = arith.constant 0 : index
    %7 = vector.load %arg5[%c0_6, %c0_7, %c0_8] : memref<1x128x256xf32, #tpu.memory_space<vmem>>, vector<1x128x256xf32>
    %8 = vector.shape_cast %7 : vector<1x128x256xf32> to vector<128x256xf32>
    %9 = vector.shape_cast %6 : vector<128x256xf32> to vector<1x128x256xf32>
    tpu.vector_store %arg5[%c0_6, %c0_7, %c0_8], %9 {strides = array<i32>} : memref<1x128x256xf32, #tpu.memory_space<vmem>>, vector<1x128x256xf32>,
    return
  }
  func.func @transform_0(%arg0: i32, %arg1: i32) -> (i32, i32, i32) {
    %c0_i32 = arith.constant 0 : i32
    %c0_i32_0 = arith.constant 0 : i32
    return %arg0, %c0_i32, %arg1 : i32, i32, i32
  }
  func.func @transform_1(%arg0: i32, %arg1: i32) -> (i32, i32) {
    %c0_i32 = arith.constant 0 : i32
    %c0_i32_0 = arith.constant 0 : i32
    %c0_i32_1 = arith.constant 0 : i32
    return %c0_i32, %c0_i32_0 : i32, i32
  }
  func.func @transform_2(%arg0: i32, %arg1: i32) -> (i32, i32) {
    %c0_i32 = arith.constant 0 : i32
    %c0_i32_0 = arith.constant 0 : i32
    %c0_i32_1 = arith.constant 0 : i32
    return %c0_i32, %c0_i32_0 : i32, i32
  }
  func.func @transform_3(%arg0: i32, %arg1: i32) -> (i32, i32, i32) {
    %c0_i32 = arith.constant 0 : i32
    %c0_i32_0 = arith.constant 0 : i32
    return %arg0, %c0_i32, %arg1 : i32, i32, i32
  }
}

</mosaic_0001>

<llo_original>
// kernel: tpu_custom_call.1
$region0: #{tpu_custom_call.1}
  #allocation0 [shape = 'u32[]', space=smem, size = 0x4, offset = 0x4, fixed_abs, tag = 'smem constant byte address 0x4 - core index']
  #allocation1 [shape = 'u32[144,128]{1,0:T(1,128)}', space=vmem, size = 0x12000, scoped, tag = 'internal scratch']
  %s0 = inlined_call_operand.hbm [shape: f32[1,128,512], index: 0, kind: input, shape index: {}]
  %s1 = inlined_call_operand.vmem [shape: f32[128,128], index: 1, kind: input, shape index: {}]
  %s2 = inlined_call_operand.vmem [shape: f32[128,1], index: 2, kind: input, shape index: {}]
  %s3 = inlined_call_operand.hbm [shape: f32[1,128,512], index: 3, kind: output, shape index: {}]
  %s4 = sld [smem:[#allocation0]]
  $region49: #{tpu_custom_call.1} parent=0
    _
  %s6 = ssub.s32 1, %s4
  %s7 = scalar_select 0, %s6, %s4
  $region1: #{tpu_custom_call.1} parent=0
    #allocation2 [shape = 'u8[262144]{0}', space=vmem, size = 0x40000, scoped, tag = 'input window, operand 0']
    #allocation3 [shape = 's32[2]{0}', space=sflag, size = 0x8, scoped, tag = 'scoped memory for tpu_custom_call.1']
    #allocation4 [shape = 's32[2]{0}', space=sflag, size = 0x8, scoped, tag = 'scoped memory for tpu_custom_call.1']
    #allocation5 [shape = 'u8[262144]{0}', space=vmem, size = 0x40000, scoped, tag = 'output window, operand 0']
    %8 = vsyncpa [#allocation3], 0
    %s9 = scalar_lea.sflag [#allocation3], 1
    %10 = vsyncpa %s9, 0
    %11 = vsyncpa [#allocation4], 0
    %s12 = scalar_lea.sflag [#allocation4], 1
    %13 = vsyncpa %s12, 0
    loop: start=0, step=1, limit=4
    $region2: #{tpu_custom_call.1} parent=1 // loop_pre_header
      _
    $region3: #{tpu_custom_call.1} parent=1 // loop_header
      %s15 = sphi 0, %s19
      %p16 = scmp.ge.s32.totalorder %s15, 4
      %s22 = sphi 0, %s34
      %s23 = sphi 0, %s30
      %s24 = sphi 0, %s22
      %s25 = sphi 0, %s23
      %s26 = sphi 0, %s24
      %s27 = sphi 0, %s25
      %s39 = sphi 0, %s41
      %s42 = sphi 0, %s39
      %s43 = sphi 0, %s42
      %s59 = sphi 0, %s43
      %s63 = sphi 0, %s63
      %s65 = sphi 0, %s63
      %s66 = sphi 0, %s65
      %s80 = sphi 0, %s66
      %s84 = sphi 0, %s84
      %s86 = sphi 0, %s84
      %s87 = sphi 0, %s86
      %s101 = sphi 0, %s87
      %s109 = sphi 0, %s111
      %s112 = sphi 0, %s109
      %s113 = sphi 0, %s112
      %s129 = sphi 0, %s113
    $region4: #{tpu_custom_call.1} parent=1 // loop_header_branch
      %18 = sbr.rel (%p16) target = $region8
    $region5: #{tpu_custom_call.1} parent=1 // loop_body
      %s20 = ssub.s32 %s15, 1
      %s21 = ssub.s32 %s15, 2
      %s28 = sadd.s32 1, %s23
      %p29 = scmp.ge.s32.totalorder %s28, 2
      %s30 = scalar_select %p29, 0, %s28
      %s31 = sadd.s32 1, %s22
      %s32 = scalar_select %p29, %s31, %s22
      %p33 = scmp.ge.s32.totalorder %s32, 1
      %s34 = scalar_select %p33, 0, %s32
      %s35 = ssub.s32 %s22, %s34
      %s36 = ssub.s32 %s23, %s30
      %s37 = sor.u32 %s35, %s36
      %p38 = scmp.eq.s32.totalorder %s37, 0
      %s40 = sadd.s32 %s39, 1
      %s41 = scalar_select %p38, %s39, %s40
      %p44 = pneg %p38
      %p45 = scmp.eq.s32.totalorder %s15, 1
      %p46 = por %p44, %p45
      %p47 = scmp.ne.s32.totalorder %s39, %s42
      %p48 = scmp.eq.s32.totalorder %s15, 0
      %p49 = por %p47, %p48
      %p50 = scmp.ne.s32.totalorder %s39, %s42
      %p51 = scmp.eq.s32.totalorder %s20, 1
      %p52 = por %p50, %p51
      %p53 = scmp.ne.s32.totalorder %s42, %s43
      %p54 = scmp.eq.s32.totalorder %s20, 0
      %p55 = por %p53, %p54
      %p56 = scmp.ne.s32.totalorder %s42, %s43
      %p57 = scmp.eq.s32.totalorder %s21, 1
      %p58 = por %p56, %p57
      %p60 = scmp.ne.s32.totalorder %s43, %s59
      %p61 = scmp.eq.s32.totalorder %s21, 0
      %p62 = por %p60, %p61
      %s64 = sadd.s32 %s63, 1
      %p67 = scmp.eq.s32.totalorder %s15, 1
      %p68 = scmp.ne.s32.totalorder %s63, %s65
      %p69 = scmp.eq.s32.totalorder %s15, 0
      %p70 = por %p68, %p69
      %p71 = scmp.ne.s32.totalorder %s63, %s65
      %p72 = scmp.eq.s32.totalorder %s20, 1
      %p73 = por %p71, %p72
      %p74 = scmp.ne.s32.totalorder %s65, %s66
      %p75 = scmp.eq.s32.totalorder %s20, 0
      %p76 = por %p74, %p75
      %p77 = scmp.ne.s32.totalorder %s65, %s66
      %p78 = scmp.eq.s32.totalorder %s21, 1
      %p79 = por %p77, %p78
      %p81 = scmp.ne.s32.totalorder %s66, %s80
      %p82 = scmp.eq.s32.totalorder %s21, 0
      %p83 = por %p81, %p82
      %s85 = sadd.s32 %s84, 1
      %p88 = scmp.eq.s32.totalorder %s15, 1
      %p89 = scmp.ne.s32.totalorder %s84, %s86
      %p90 = scmp.eq.s32.totalorder %s15, 0
      %p91 = por %p89, %p90
      %p92 = scmp.ne.s32.totalorder %s84, %s86
      %p93 = scmp.eq.s32.totalorder %s20, 1
      %p94 = por %p92, %p93
      %p95 = scmp.ne.s32.totalorder %s86, %s87
      %p96 = scmp.eq.s32.totalorder %s20, 0
      %p97 = por %p95, %p96
      %p98 = scmp.ne.s32.totalorder %s86, %s87
      %p99 = scmp.eq.s32.totalorder %s21, 1
      %p100 = por %p98, %p99
      %p102 = scmp.ne.s32.totalorder %s87, %s101
      %p103 = scmp.eq.s32.totalorder %s21, 0
      %p104 = por %p102, %p103
      %s105 = ssub.s32 %s22, %s34
      %s106 = ssub.s32 %s23, %s30
      %s107 = sor.u32 %s105, %s106
      %p108 = scmp.eq.s32.totalorder %s107, 0
      %s110 = sadd.s32 %s109, 1
      %s111 = scalar_select %p108, %s109, %s110
      %p114 = pneg %p108
      %p115 = scmp.eq.s32.totalorder %s15, 1
      %p116 = por %p114, %p115
      %p117 = scmp.ne.s32.totalorder %s109, %s112
      %p118 = scmp.eq.s32.totalorder %s15, 0
      %p119 = por %p117, %p118
      %p120 = scmp.ne.s32.totalorder %s109, %s112
      %p121 = scmp.eq.s32.totalorder %s20, 1
      %p122 = por %p120, %p121
      %p123 = scmp.ne.s32.totalorder %s112, %s113
      %p124 = scmp.eq.s32.totalorder %s20, 0
      %p125 = por %p123, %p124
      %p126 = scmp.ne.s32.totalorder %s112, %s113
      %p127 = scmp.eq.s32.totalorder %s21, 1
      %p128 = por %p126, %p127
      %p130 = scmp.ne.s32.totalorder %s113, %s129
      %p131 = scmp.eq.s32.totalorder %s21, 0
      %p132 = por %p130, %p131
      %p133 = scmp.le.s32.totalorder 1, %s15
      %p134 = scmp.lt.s32.totalorder %s15, 3
      %p135 = pnand %p133, %p134
      %p136 = pneg %p135
      // Predicated region
      $region9: #{tpu_custom_call.1} parent=5 // pred_check
        _
      $region10: #{tpu_custom_call.1} parent=5 // pred_check_branch
        %138 = sbr.rel (%p135) target = $region12
      $region11: #{tpu_custom_call.1} parent=5 // pred_region
        %s139 = ssub.s32 %s15, 1
        // Predicated region
        $region13: #{tpu_custom_call.1} parent=11 // pred_check
          %p140 = pneg %p76
        $region14: #{tpu_custom_call.1} parent=11 // pred_check_branch
          %142 = sbr.rel (%p140) target = $region16
        $region15: #{tpu_custom_call.1} parent=11 // pred_region
          _
        $region16: #{tpu_custom_call.1} parent=11 // pred_fallthru
          _
        // Predicated region
        $region17: #{tpu_custom_call.1} parent=11 // pred_check
          %p143 = pneg %p97
        $region18: #{tpu_custom_call.1} parent=11 // pred_check_branch
          %145 = sbr.rel (%p143) target = $region20
        $region19: #{tpu_custom_call.1} parent=11 // pred_region
          _
        $region20: #{tpu_custom_call.1} parent=11 // pred_fallthru
          _
      $region12: #{tpu_custom_call.1} parent=5 // pred_fallthru
        _
      %p146 = scmp.lt.s32.totalorder %s15, 2
      // Predicated region
      $region21: #{tpu_custom_call.1} parent=5 // pred_check
        %p147 = pneg %p146
      $region22: #{tpu_custom_call.1} parent=5 // pred_check_branch
        %149 = sbr.rel (%p147) target = $region24
      $region23: #{tpu_custom_call.1} parent=5 // pred_region
        // Predicated region
        $region25: #{tpu_custom_call.1} parent=23 // pred_check
          %p150 = pneg %p49
        $region26: #{tpu_custom_call.1} parent=23 // pred_check_branch
          %152 = sbr.rel (%p150) target = $region28
        $region27: #{tpu_custom_call.1} parent=23 // pred_region
          %s153 = sand.u32 %s39, 1
          %s154 = scalar_lea.sflag [#allocation3], %s153
          %s155 = sand.u32 %s39, 1
          %s156 = smul.addr %s155, 256
          %s157 = scalar_lea.vmem [#allocation2], %s156
          %s158 = smul.u32 2, %s23
          %s160 = ssub.s32 4096, 4096
          %161 = vsyncadd %s154, %s160
          %s162 = smul.addr %s22, 64
          %s163 = sadd.s32 %s158, %s162
          %s164 = smul.addr %s163, 128
          %s165 = scalar_lea.hbm %s0, %s164
          %s166 = sshll.u32 %s157, 4
          %s167 = int_to_ptr.vmem [resolvable:$true] %s166
          %172 = dma.hbm_to_vmem [thread:$0]  %s165, 4096, %s167, %s154, 512, 256, 16
        $region28: #{tpu_custom_call.1} parent=23 // pred_fallthru
          _
      $region24: #{tpu_custom_call.1} parent=5 // pred_fallthru
        _
      %p173 = scmp.le.s32.totalorder 1, %s15
      %p174 = scmp.lt.s32.totalorder %s15, 3
      %p175 = pnand %p173, %p174
      %p176 = pneg %p175
      // Predicated region
      $region29: #{tpu_custom_call.1} parent=5 // pred_check
        _
      $region30: #{tpu_custom_call.1} parent=5 // pred_check_branch
        %178 = sbr.rel (%p175) target = $region32
      $region31: #{tpu_custom_call.1} parent=5 // pred_region
        %s179 = ssub.s32 %s15, 1
        %s180 = sand.u32 %s42, 1
        %s181 = scalar_lea.sflag [#allocation3], %s180
        %s182 = sand.u32 %s42, 1
        %s183 = smul.addr %s182, 256
        %s184 = scalar_lea.vmem [#allocation2], %s183
        // Predicated region
        $region33: #{tpu_custom_call.1} parent=31 // pred_check
          %p185 = pneg %p55
        $region34: #{tpu_custom_call.1} parent=31 // pred_check_branch
          %187 = sbr.rel (%p185) target = $region36
        $region35: #{tpu_custom_call.1} parent=31 // pred_region
          %188 = dma.done %s181, 4096
        $region36: #{tpu_custom_call.1} parent=31 // pred_fallthru
          _
        %s189 = sand.u32 %s42, 1
        %s190 = scalar_lea.sflag [#allocation3], %s189
        %s191 = sand.u32 %s42, 1
        %s192 = smul.addr %s191, 256
        %s193 = scalar_lea.vmem [#allocation2], %s192
        %p194 = pneg %p55
        %p195 = pneg %p52
        %p196 = pneg %p76
        %p197 = pneg %p73
        %p198 = pneg %p97
        %p199 = pneg %p94
        %p200 = pneg %p125
        %p201 = pneg %p122
        %s202 = sand.u32 %s112, 1
        %s203 = scalar_lea.sflag [#allocation4], %s202
        %s204 = sand.u32 %s112, 1
        %s205 = smul.addr %s204, 256
        %s206 = scalar_lea.vmem [#allocation5], %s205
        %s207 = smul.u32 2, %s25
        %s208 = smul.u32 2, %s25
        %v209 = vld [vmem:[%s1] sm:$0xff]
        %v210 = vld [vmem:[%s1 + $0x8] sm:$0xff]
        %v211 = vld [vmem:[%s1 + $0x10] sm:$0xff]
        %v212 = vld [vmem:[%s1 + $0x18] sm:$0xff]
        %v213 = vld [vmem:[%s1 + $0x20] sm:$0xff]
        %v214 = vld [vmem:[%s1 + $0x28] sm:$0xff]
        %v215 = vld [vmem:[%s1 + $0x30] sm:$0xff]
        %v216 = vld [vmem:[%s1 + $0x38] sm:$0xff]
        %v217 = vld [vmem:[%s1 + $0x40] sm:$0xff]
        %v218 = vld [vmem:[%s1 + $0x48] sm:$0xff]
        %v219 = vld [vmem:[%s1 + $0x50] sm:$0xff]
        %v220 = vld [vmem:[%s1 + $0x58] sm:$0xff]
        %v221 = vld [vmem:[%s1 + $0x60] sm:$0xff]
        %v222 = vld [vmem:[%s1 + $0x68] sm:$0xff]
        %v223 = vld [vmem:[%s1 + $0x70] sm:$0xff]
        %v224 = vld [vmem:[%s1 + $0x78] sm:$0xff]
        %v225 = vld [vmem:[%s184] sm:$0xff]
        %v226 = vld [vmem:[%s184 + $0x8] sm:$0xff]
        %v227 = vld [vmem:[%s184 + $0x10] sm:$0xff]
        %v228 = vld [vmem:[%s184 + $0x18] sm:$0xff]
        %v229 = vld [vmem:[%s184 + $0x20] sm:$0xff]
        %v230 = vld [vmem:[%s184 + $0x28] sm:$0xff]
        %v231 = vld [vmem:[%s184 + $0x30] sm:$0xff]
        %v232 = vld [vmem:[%s184 + $0x38] sm:$0xff]
        %v233 = vld [vmem:[%s184 + $0x40] sm:$0xff]
        %v234 = vld [vmem:[%s184 + $0x48] sm:$0xff]
        %v235 = vld [vmem:[%s184 + $0x50] sm:$0xff]
        %v236 = vld [vmem:[%s184 + $0x58] sm:$0xff]
        %v237 = vld [vmem:[%s184 + $0x60] sm:$0xff]
        %v238 = vld [vmem:[%s184 + $0x68] sm:$0xff]
        %v239 = vld [vmem:[%s184 + $0x70] sm:$0xff]
        %v240 = vld [vmem:[%s184 + $0x78] sm:$0xff]
        %v241 = vld [vmem:[%s184 + $0x80] sm:$0xff]
        %v242 = vld [vmem:[%s184 + $0x88] sm:$0xff]
        %v243 = vld [vmem:[%s184 + $0x90] sm:$0xff]
        %v244 = vld [vmem:[%s184 + $0x98] sm:$0xff]
        %v245 = vld [vmem:[%s184 + $0xa0] sm:$0xff]
        %v246 = vld [vmem:[%s184 + $0xa8] sm:$0xff]
        %v247 = vld [vmem:[%s184 + $0xb0] sm:$0xff]
        %v248 = vld [vmem:[%s184 + $0xb8] sm:$0xff]
        %v249 = vld [vmem:[%s184 + $0xc0] sm:$0xff]
        %v250 = vld [vmem:[%s184 + $0xc8] sm:$0xff]
        %v251 = vld [vmem:[%s184 + $0xd0] sm:$0xff]
        %v252 = vld [vmem:[%s184 + $0xd8] sm:$0xff]
        %v253 = vld [vmem:[%s184 + $0xe0] sm:$0xff]
        %v254 = vld [vmem:[%s184 + $0xe8] sm:$0xff]
        %v255 = vld [vmem:[%s184 + $0xf0] sm:$0xff]
        %v256 = vld [vmem:[%s184 + $0xf8] sm:$0xff]
        %v257 = vld [vmem:[%s2] sm:$0xff]
        %v258 = vld [vmem:[%s2 + $0x8] sm:$0xff]
        %v259 = vld [vmem:[%s2 + $0x10] sm:$0xff]
        %v260 = vld [vmem:[%s2 + $0x18] sm:$0xff]
        %v261 = vld [vmem:[%s2 + $0x20] sm:$0xff]
        %v262 = vld [vmem:[%s2 + $0x28] sm:$0xff]
        %v263 = vld [vmem:[%s2 + $0x30] sm:$0xff]
        %v264 = vld [vmem:[%s2 + $0x38] sm:$0xff]
        %v265 = vld [vmem:[%s2 + $0x40] sm:$0xff]
        %v266 = vld [vmem:[%s2 + $0x48] sm:$0xff]
        %v267 = vld [vmem:[%s2 + $0x50] sm:$0xff]
        %v268 = vld [vmem:[%s2 + $0x58] sm:$0xff]
        %v269 = vld [vmem:[%s2 + $0x60] sm:$0xff]
        %v270 = vld [vmem:[%s2 + $0x68] sm:$0xff]
        %v271 = vld [vmem:[%s2 + $0x70] sm:$0xff]
        %v272 = vld [vmem:[%s2 + $0x78] sm:$0xff]
        %274 = vset.pattern.permute.xlu0 0
        %275 = vperm.xlu0 %274, %v257
        %v276 = vpop.permute.xlu0 %275
        %279 = vset.pattern.permute.xlu0 0
        %280 = vperm.xlu0 %279, %v258
        %v281 = vpop.permute.xlu0 %280
        %284 = vset.pattern.permute.xlu0 0
        %285 = vperm.xlu0 %284, %v259
        %v286 = vpop.permute.xlu0 %285
        %289 = vset.pattern.permute.xlu0 0
        %290 = vperm.xlu0 %289, %v260
        %v291 = vpop.permute.xlu0 %290
        %294 = vset.pattern.permute.xlu0 0
        %295 = vperm.xlu0 %294, %v261
        %v296 = vpop.permute.xlu0 %295
        %299 = vset.pattern.permute.xlu0 0
        %300 = vperm.xlu0 %299, %v262
        %v301 = vpop.permute.xlu0 %300
        %304 = vset.pattern.permute.xlu0 0
        %305 = vperm.xlu0 %304, %v263
        %v306 = vpop.permute.xlu0 %305
        %309 = vset.pattern.permute.xlu0 0
        %310 = vperm.xlu0 %309, %v264
        %v311 = vpop.permute.xlu0 %310
        %314 = vset.pattern.permute.xlu0 0
        %315 = vperm.xlu0 %314, %v265
        %v316 = vpop.permute.xlu0 %315
        %319 = vset.pattern.permute.xlu0 0
        %320 = vperm.xlu0 %319, %v266
        %v321 = vpop.permute.xlu0 %320
        %324 = vset.pattern.permute.xlu0 0
        %325 = vperm.xlu0 %324, %v267
        %v326 = vpop.permute.xlu0 %325
        %329 = vset.pattern.permute.xlu0 0
        %330 = vperm.xlu0 %329, %v268
        %v331 = vpop.permute.xlu0 %330
        %334 = vset.pattern.permute.xlu0 0
        %335 = vperm.xlu0 %334, %v269
        %v336 = vpop.permute.xlu0 %335
        %339 = vset.pattern.permute.xlu0 0
        %340 = vperm.xlu0 %339, %v270
        %v341 = vpop.permute.xlu0 %340
        %344 = vset.pattern.permute.xlu0 0
        %345 = vperm.xlu0 %344, %v271
        %v346 = vpop.permute.xlu0 %345
        %349 = vset.pattern.permute.xlu0 0
        %350 = vperm.xlu0 %349, %v272
        %v351 = vpop.permute.xlu0 %350
        %353 = vmatprep.subr.mxu0 %v226
        %354 = vmatpush1.msra.mxu0 %v225
        %355 = vmatprep.subr.mxu0 %v228
        %356 = vmatpush1.msra.mxu0 %v227
        %357 = vmatprep.subr.mxu0 %v230
        %358 = vmatpush1.msra.mxu0 %v229
        %359 = vmatprep.subr.mxu0 %v232
        %360 = vmatpush1.msra.mxu0 %v231
        %361 = vmatprep.subr.mxu0 %v234
        %362 = vmatpush1.msra.mxu0 %v233
        %363 = vmatprep.subr.mxu0 %v236
        %364 = vmatpush1.msra.mxu0 %v235
        %365 = vmatprep.subr.mxu0 %v238
        %366 = vmatpush1.msra.mxu0 %v237
        %367 = vmatprep.subr.mxu0 %v240
        %368 = vmatpush1.msra.mxu0 %v239
        %369 = vmatprep.subr.mxu0 %v242
        %370 = vmatpush1.msra.mxu0 %v241
        %371 = vmatprep.subr.mxu0 %v244
        %372 = vmatpush1.msra.mxu0 %v243
        %373 = vmatprep.subr.mxu0 %v246
        %374 = vmatpush1.msra.mxu0 %v245
        %375 = vmatprep.subr.mxu0 %v248
        %376 = vmatpush1.msra.mxu0 %v247
        %377 = vmatprep.subr.mxu0 %v250
        %378 = vmatpush1.msra.mxu0 %v249
        %379 = vmatprep.subr.mxu0 %v252
        %380 = vmatpush1.msra.mxu0 %v251
        %381 = vmatprep.subr.mxu0 %v254
        %382 = vmatpush1.msra.mxu0 %v253
        %383 = vmatprep.subr.mxu0 %v256
        %384 = vmatpush1.msra.mxu0 %v255
        %385 = vmatprep.subr.mxu0 0.0
        %386 = vmatpush1.msra.mxu0 0.0
        %387 = vmatprep.subr.mxu0 0.0
        %388 = vmatpush1.msra.mxu0 0.0
        %389 = vmatprep.subr.mxu0 0.0
        %390 = vmatpush1.msra.mxu0 0.0
        %391 = vmatprep.subr.mxu0 0.0
        %392 = vmatpush1.msra.mxu0 0.0
        %393 = vmatprep.subr.mxu0 0.0
        %394 = vmatpush1.msra.mxu0 0.0
        %395 = vmatprep.subr.mxu0 0.0
        %396 = vmatpush1.msra.mxu0 0.0
        %397 = vmatprep.subr.mxu0 0.0
        %398 = vmatpush1.msra.mxu0 0.0
        %399 = vmatprep.subr.mxu0 0.0
        %400 = vmatpush1.msra.mxu0 0.0
        %401 = vmatprep.subr.mxu0 0.0
        %402 = vmatpush1.msra.mxu0 0.0
        %403 = vmatprep.subr.mxu0 0.0
        %404 = vmatpush1.msra.mxu0 0.0
        %405 = vmatprep.subr.mxu0 0.0
        %406 = vmatpush1.msra.mxu0 0.0
        %407 = vmatprep.subr.mxu0 0.0
        %408 = vmatpush1.msra.mxu0 0.0
        %409 = vmatprep.subr.mxu0 0.0
        %410 = vmatpush1.msra.mxu0 0.0
        %411 = vmatprep.subr.mxu0 0.0
        %412 = vmatpush1.msra.mxu0 0.0
        %413 = vmatprep.subr.mxu0 0.0
        %414 = vmatpush1.msra.mxu0 0.0
        %415 = vmatprep.subr.mxu0 0.0
        %416 = vmatpush1.msra.mxu0 0.0
        %417 = vmatprep.mubr.f32.mxu0 0.0
        %418 = vmatmul.mubr.f32.gmra.mrb[0].mxu0 %v209
        %v419 = vpop.f32.mrb[0].mxu0
        %v420 = vadd.f32 %v276, %v419
        %v421 = vpop.f32.mrb[0].mxu0
        %v422 = vadd.f32 %v276, %v421
        %423 = vmatprep.mubr.f32.mxu0 0.0
        %424 = vmatmul.mubr.f32.gmra.mrb[0].mxu0 %v210
        %v425 = vpop.f32.mrb[0].mxu0
        %v426 = vadd.f32 %v281, %v425
        %v427 = vpop.f32.mrb[0].mxu0
        %v428 = vadd.f32 %v281, %v427
        %429 = vmatprep.mubr.f32.mxu0 0.0
        %430 = vmatmul.mubr.f32.gmra.mrb[0].mxu0 %v211
        %v431 = vpop.f32.mrb[0].mxu0
        %v432 = vadd.f32 %v286, %v431
        %v433 = vpop.f32.mrb[0].mxu0
        %v434 = vadd.f32 %v286, %v433
        %435 = vmatprep.mubr.f32.mxu0 0.0
        %436 = vmatmul.mubr.f32.gmra.mrb[0].mxu0 %v212
        %v437 = vpop.f32.mrb[0].mxu0
        %v438 = vadd.f32 %v291, %v437
        %v439 = vpop.f32.mrb[0].mxu0
        %v440 = vadd.f32 %v291, %v439
        %441 = vmatprep.mubr.f32.mxu0 0.0
        %442 = vmatmul.mubr.f32.gmra.mrb[0].mxu0 %v213
        %v443 = vpop.f32.mrb[0].mxu0
        %v444 = vadd.f32 %v296, %v443
        %v445 = vpop.f32.mrb[0].mxu0
        %v446 = vadd.f32 %v296, %v445
        %447 = vmatprep.mubr.f32.mxu0 0.0
        %448 = vmatmul.mubr.f32.gmra.mrb[0].mxu0 %v214
        %v449 = vpop.f32.mrb[0].mxu0
        %v450 = vadd.f32 %v301, %v449
        %v451 = vpop.f32.mrb[0].mxu0
        %v452 = vadd.f32 %v301, %v451
        %453 = vmatprep.mubr.f32.mxu0 0.0
        %454 = vmatmul.mubr.f32.gmra.mrb[0].mxu0 %v215
        %v455 = vpop.f32.mrb[0].mxu0
        %v456 = vadd.f32 %v306, %v455
        %v457 = vpop.f32.mrb[0].mxu0
        %v458 = vadd.f32 %v306, %v457
        %459 = vmatprep.mubr.f32.mxu0 0.0
        %460 = vmatmul.mubr.f32.gmra.mrb[0].mxu0 %v216
        %v461 = vpop.f32.mrb[0].mxu0
        %v462 = vadd.f32 %v311, %v461
        %v463 = vpop.f32.mrb[0].mxu0
        %v464 = vadd.f32 %v311, %v463
        %465 = vmatprep.mubr.f32.mxu0 0.0
        %466 = vmatmul.mubr.f32.gmra.mrb[0].mxu0 %v217
        %v467 = vpop.f32.mrb[0].mxu0
        %v468 = vadd.f32 %v316, %v467
        %v469 = vpop.f32.mrb[0].mxu0
        %v470 = vadd.f32 %v316, %v469
        %471 = vmatprep.mubr.f32.mxu0 0.0
        %472 = vmatmul.mubr.f32.gmra.mrb[0].mxu0 %v218
        %v473 = vpop.f32.mrb[0].mxu0
        %v474 = vadd.f32 %v321, %v473
        %v475 = vpop.f32.mrb[0].mxu0
        %v476 = vadd.f32 %v321, %v475
        %477 = vmatprep.mubr.f32.mxu0 0.0
        %478 = vmatmul.mubr.f32.gmra.mrb[0].mxu0 %v219
        %v479 = vpop.f32.mrb[0].mxu0
        %v480 = vadd.f32 %v326, %v479
        %v481 = vpop.f32.mrb[0].mxu0
        %v482 = vadd.f32 %v326, %v481
        %483 = vmatprep.mubr.f32.mxu0 0.0
        %484 = vmatmul.mubr.f32.gmra.mrb[0].mxu0 %v220
        %v485 = vpop.f32.mrb[0].mxu0
        %v486 = vadd.f32 %v331, %v485
        %v487 = vpop.f32.mrb[0].mxu0
        %v488 = vadd.f32 %v331, %v487
        %489 = vmatprep.mubr.f32.mxu0 0.0
        %490 = vmatmul.mubr.f32.gmra.mrb[0].mxu0 %v221
        %v491 = vpop.f32.mrb[0].mxu0
        %v492 = vadd.f32 %v336, %v491
        %v493 = vpop.f32.mrb[0].mxu0
        %v494 = vadd.f32 %v336, %v493
        %495 = vmatprep.mubr.f32.mxu0 0.0
        %496 = vmatmul.mubr.f32.gmra.mrb[0].mxu0 %v222
        %v497 = vpop.f32.mrb[0].mxu0
        %v498 = vadd.f32 %v341, %v497
        %v499 = vpop.f32.mrb[0].mxu0
        %v500 = vadd.f32 %v341, %v499
        %501 = vmatprep.mubr.f32.mxu0 0.0
        %502 = vmatmul.mubr.f32.gmra.mrb[0].mxu0 %v223
        %v503 = vpop.f32.mrb[0].mxu0
        %v504 = vadd.f32 %v346, %v503
        %v505 = vpop.f32.mrb[0].mxu0
        %v506 = vadd.f32 %v346, %v505
        %507 = vmatprep.mubr.f32.mxu0 0.0
        %508 = vmatmul.mubr.f32.gmra.mrb[0].mxu0 %v224
        %v509 = vpop.f32.mrb[0].mxu0
        %v510 = vadd.f32 %v351, %v509
        %v511 = vpop.f32.mrb[0].mxu0
        %v512 = vadd.f32 %v351, %v511
        %513 = vdwg.mxu0
        %514 = vst [vmem:[%s206] sm:$0xff] %v420
        %515 = vst [vmem:[%s206 + $0x8] sm:$0xff] %v422
        %516 = vst [vmem:[%s206 + $0x10] sm:$0xff] %v426
        %517 = vst [vmem:[%s206 + $0x18] sm:$0xff] %v428
        %518 = vst [vmem:[%s206 + $0x20] sm:$0xff] %v432
        %519 = vst [vmem:[%s206 + $0x28] sm:$0xff] %v434
        %520 = vst [vmem:[%s206 + $0x30] sm:$0xff] %v438
        %521 = vst [vmem:[%s206 + $0x38] sm:$0xff] %v440
        %522 = vst [vmem:[%s206 + $0x40] sm:$0xff] %v444
        %523 = vst [vmem:[%s206 + $0x48] sm:$0xff] %v446
        %524 = vst [vmem:[%s206 + $0x50] sm:$0xff] %v450
        %525 = vst [vmem:[%s206 + $0x58] sm:$0xff] %v452
        %526 = vst [vmem:[%s206 + $0x60] sm:$0xff] %v456
        %527 = vst [vmem:[%s206 + $0x68] sm:$0xff] %v458
        %528 = vst [vmem:[%s206 + $0x70] sm:$0xff] %v462
        %529 = vst [vmem:[%s206 + $0x78] sm:$0xff] %v464
        %530 = vst [vmem:[%s206 + $0x80] sm:$0xff] %v468
        %531 = vst [vmem:[%s206 + $0x88] sm:$0xff] %v470
        %532 = vst [vmem:[%s206 + $0x90] sm:$0xff] %v474
        %533 = vst [vmem:[%s206 + $0x98] sm:$0xff] %v476
        %534 = vst [vmem:[%s206 + $0xa0] sm:$0xff] %v480
        %535 = vst [vmem:[%s206 + $0xa8] sm:$0xff] %v482
        %536 = vst [vmem:[%s206 + $0xb0] sm:$0xff] %v486
        %537 = vst [vmem:[%s206 + $0xb8] sm:$0xff] %v488
        %538 = vst [vmem:[%s206 + $0xc0] sm:$0xff] %v492
        %539 = vst [vmem:[%s206 + $0xc8] sm:$0xff] %v494
        %540 = vst [vmem:[%s206 + $0xd0] sm:$0xff] %v498
        %541 = vst [vmem:[%s206 + $0xd8] sm:$0xff] %v500
        %542 = vst [vmem:[%s206 + $0xe0] sm:$0xff] %v504
        %543 = vst [vmem:[%s206 + $0xe8] sm:$0xff] %v506
        %544 = vst [vmem:[%s206 + $0xf0] sm:$0xff] %v510
        %545 = vst [vmem:[%s206 + $0xf8] sm:$0xff] %v512
        %s546 = sand.u32 %s112, 1
        %s547 = scalar_lea.sflag [#allocation4], %s546
        %s548 = sand.u32 %s112, 1
        %s549 = smul.addr %s548, 256
        %s550 = scalar_lea.vmem [#allocation5], %s549
        // Predicated region
        $region37: #{tpu_custom_call.1} parent=31 // pred_check
          %p551 = pneg %p122
        $region38: #{tpu_custom_call.1} parent=31 // pred_check_branch
          %553 = sbr.rel (%p551) target = $region40
        $region39: #{tpu_custom_call.1} parent=31 // pred_region
          %s554 = smul.u32 2, %s25
          %s556 = ssub.s32 4096, 4096
          %557 = vsyncadd %s547, %s556
          %s558 = smul.addr %s24, 64
          %s559 = sadd.s32 %s554, %s558
          %s560 = smul.addr %s559, 128
          %s561 = scalar_lea.hbm %s3, %s560
          %s562 = sshll.u32 %s550, 4
          %s563 = int_to_ptr.vmem [resolvable:$true] %s562
          %568 = dma.vmem_to_hbm [thread:$0]  %s563, 4096, %s561, %s547, 256, 512, 16
        $region40: #{tpu_custom_call.1} parent=31 // pred_fallthru
          _
      $region32: #{tpu_custom_call.1} parent=5 // pred_fallthru
        _
      %p569 = scmp.le.s32.totalorder 2, %s15
      // Predicated region
      $region41: #{tpu_custom_call.1} parent=5 // pred_check
        %p570 = pneg %p569
      $region42: #{tpu_custom_call.1} parent=5 // pred_check_branch
        %572 = sbr.rel (%p570) target = $region44
      $region43: #{tpu_custom_call.1} parent=5 // pred_region
        %s573 = ssub.s32 %s15, 2
        // Predicated region
        $region45: #{tpu_custom_call.1} parent=43 // pred_check
          %p574 = pneg %p128
        $region46: #{tpu_custom_call.1} parent=43 // pred_check_branch
          %576 = sbr.rel (%p574) target = $region48
        $region47: #{tpu_custom_call.1} parent=43 // pred_region
          %s577 = sand.u32 %s113, 1
          %s578 = scalar_lea.sflag [#allocation4], %s577
          %s579 = sand.u32 %s113, 1
          %s580 = smul.addr %s579, 256
          %s581 = scalar_lea.vmem [#allocation5], %s580
          %582 = dma.done %s578, 4096
        $region48: #{tpu_custom_call.1} parent=43 // pred_fallthru
          _
      $region44: #{tpu_custom_call.1} parent=5 // pred_fallthru
        _
    $region6: #{tpu_custom_call.1} parent=1 // loop_footer
      %s19 = sadd.s32 1, %s15
    $region7: #{tpu_custom_call.1} parent=1 // loop_footer_branch
      %14 = sbr.rel target = $region3
    $region8: #{tpu_custom_call.1} parent=1 // loop_exit
      _
    %583 = vsyncpa [#allocation3], 1
    %s584 = scalar_lea.sflag [#allocation3], 1
    %585 = vsyncpa %s584, 1
    %586 = vsyncpa [#allocation4], 1
    %s587 = scalar_lea.sflag [#allocation4], 1
    %588 = vsyncpa %s587, 1

</llo_original>
